<compile_context>
chip_gen: v7x
topology: tpu7x:2x2x1
jax: 0.10.0
libtpu: 0.0.40
codegen_flags: <defaults>
</compile_context>

<pallas_src>
import jax
import jax.numpy as jnp
from jax.experimental import pallas as pl
from jax.experimental.pallas import tpu as pltpu


def _round_up(a, b):
    return (a + b - 1) // b * b


def _vmem_budget_bytes():
    """~60% of physical VMEM (128 MiB on v5e/v6e, 64 MiB/TC on v7x)."""
    try:
        cap = int(pltpu.get_tpu_info().vmem_capacity_bytes)
    except Exception:
        cap = 64 * 1024 * 1024            # conservative (v7x-sized) fallback
    return int(cap * 0.6)


def _pick_tile(dim_r, target, align):
    """Aligned tile size <= target for a dim already rounded to `align`.

    Prefers sizes that minimize total padded extent (exact divisors win);
    searches [target/2, target] so we never trade away too much tile size.
    """
    if dim_r <= target:
        return dim_r
    lo = max(align, (target // 2) // align * align)
    best_cand, best_padded = None, None
    for cand in range(target, lo - 1, -align):
        padded = -(-dim_r // cand) * cand
        if best_padded is None or padded < best_padded:
            best_cand, best_padded = cand, padded
        if padded == dim_r:               # exact divisor, largest first
            return cand
    return best_cand


def _select_tiles(M, N, K, out_itemsize, vmem_budget):
    Mr, Nr, Kr = _round_up(M, 8), _round_up(N, 128), _round_up(K, 128)

    # Big output tiles -> high arithmetic intensity (aim MXU-bound on all gens).
    tm = _pick_tile(Mr, 1024, 8)
    tn = _pick_tile(Nr, 1024, 128)
    tk = _pick_tile(Kr, 2048, 128)

    def footprint(tm_, tn_, tk_):
        # double-buffered bf16 x / w tiles + double-buffered output tile
        # + f32 accumulator scratch + bias row.
        return (2 * tm_ * tk_ * 2 + 2 * tk_ * tn_ * 2
                + 2 * tm_ * tn_ * out_itemsize + tm_ * tn_ * 4 + 2 * Nr * 4)

    # Shrink (largest contributor first) until the tile set fits the budget.
    while footprint(tm, tn, tk) > vmem_budget:
        if tk > 512 and tk >= max(tm, tn):
            tk = max(512, _round_up(tk // 2, 128))
        elif tn >= tm and tn > 128:
            tn = max(128, _round_up(tn // 2, 128))
        elif tm > 8:
            tm = max(8, _round_up(tm // 2, 8))
        elif tk > 128:
            tk = max(128, _round_up(tk // 2, 128))
        else:
            break

    # Megacore (v7x: 2 TCs/chip): if M fits one tile and N would be a single
    # block, split N in two so both cores get a 'parallel' block.  Only when
    # the split keeps 128-alignment with zero extra padding.
    if tm == Mr and tn == Nr and Nr >= 256 and Nr % 256 == 0:
        tn = Nr // 2
    return tm, tn, tk


# ---------------------------------------------------------------------------
# Pallas kernel: tiled  out = x @ W_kn + b   (W_kn stored (K, N), K-major)
# ---------------------------------------------------------------------------
def _matmul_bias_kernel(x_ref, w_ref, b_ref, o_ref, acc_ref):
    k = pl.program_id(2)

    @pl.when(k == 0)
    def _init():
        acc_ref[...] = jnp.zeros_like(acc_ref)

    # (tm, tk) @ (tk, tn) -> (tm, tn), f32 accumulation; no in-kernel transpose.
    acc_ref[...] += jnp.dot(x_ref[...], w_ref[...],
                            preferred_element_type=jnp.float32)

    # Bias add + downcast only in the K epilogue (inner loop stays pure MXU).
    @pl.when(k == pl.num_programs(2) - 1)
    def _finalize():
        o_ref[...] = (acc_ref[...] + b_ref[...]).astype(o_ref.dtype)


def fused_linear_bias(x2d, w_kn, b, *, out_dtype=None):
    """out[m, n] = sum_k x2d[m, k] * w_kn[k, n] + b[n], as one Pallas kernel.

    x2d:  (M, K) activations (cast to bf16 for the MXU)
    w_kn: (K, N) merged weight (base.T + folded adapter), K-major
    b:    (N,)   bias, added in f32 in the k-epilogue
    """
    M, K = x2d.shape
    Kw, N = w_kn.shape
    assert K == Kw
    out_dtype = out_dtype or x2d.dtype
    out_itemsize = jnp.dtype(out_dtype).itemsize

    vmem_budget = _vmem_budget_bytes()
    tm, tn, tk = _select_tiles(M, N, K, out_itemsize, vmem_budget)
    Mp, Np, Kp = _round_up(M, tm), _round_up(N, tn), _round_up(K, tk)

    # bf16 MXU inputs, f32 bias; pad only when the dims are not tile-aligned.
    xp = x2d if x2d.dtype == jnp.bfloat16 else x2d.astype(jnp.bfloat16)
    if (Mp, Kp) != (M, K):
        xp = jnp.pad(xp, ((0, Mp - M), (0, Kp - K)))
    wp = w_kn if w_kn.dtype == jnp.bfloat16 else w_kn.astype(jnp.bfloat16)
    if (Kp, Np) != (K, N):
        wp = jnp.pad(wp, ((0, Kp - K), (0, Np - N)))
    bp = b if b.dtype == jnp.float32 else b.astype(jnp.float32)
    if Np != N:
        bp = jnp.pad(bp, (0, Np - N))
    bp = bp.reshape(1, Np)

    grid = (Mp // tm, Np // tn, Kp // tk)

    out = pl.pallas_call(
        _matmul_bias_kernel,
        out_shape=jax.ShapeDtypeStruct((Mp, Np), out_dtype),
        grid_spec=pltpu.PrefetchScalarGridSpec(
            num_scalar_prefetch=0,
            grid=grid,
            in_specs=[
                pl.BlockSpec((tm, tk), lambda i, j, k: (i, k)),   # x tile
                pl.BlockSpec((tk, tn), lambda i, j, k: (k, j)),   # W_kn tile
                pl.BlockSpec((1, tn), lambda i, j, k: (0, j)),    # bias sliver
            ],
            out_specs=pl.BlockSpec((tm, tn), lambda i, j, k: (i, j)),
            scratch_shapes=[pltpu.VMEM((tm, tn), jnp.float32)],
        ),
        compiler_params=pltpu.CompilerParams(
            dimension_semantics=("parallel", "parallel", "arbitrary"),
            vmem_limit_bytes=int(vmem_budget)),
    )(xp, wp, bp)
    if (Mp, Np) != (M, N):
        out = out[:M, :N]
    return out


# ---------------------------------------------------------------------------
# Plain-JAX glue: packed J=3 inverse Haar DWT (pytorch_wavelets, mode='zero')
# ---------------------------------------------------------------------------
def _haar_synth_level(ll, lh, hl, hh):
    # One level of pytorch_wavelets SFB2D with the 'haar' filter bank.
    a = (ll + lh + hl + hh) * 0.5
    b = (ll + lh - hl - hh) * 0.5
    c = (ll - lh + hl - hh) * 0.5
    d = (ll - lh - hl + hh) * 0.5
    h, w = ll.shape
    row_even = jnp.stack([a, b], axis=-1)        # (h, w, 2)
    row_odd = jnp.stack([c, d], axis=-1)         # (h, w, 2)
    y = jnp.stack([row_even, row_odd], axis=1)   # (h, 2, w, 2)
    return y.reshape(2 * h, 2 * w)


def packed_idwt_j3(dense_s):
    """extract_wavelet_components_j3 + idwt2 (J=3, haar, mode='zero')."""
    N = dense_s.shape[0]
    h2, h4, h8 = N // 2, N // 4, N // 8
    ll = _haar_synth_level(dense_s[:h8, :h8], dense_s[:h8, h8:h4],
                           dense_s[h8:h4, :h8], dense_s[h8:h4, h8:h4])
    ll = _haar_synth_level(ll, dense_s[:h4, h4:h2],
                           dense_s[h4:h2, :h4], dense_s[h4:h2, h4:h2])
    ll = _haar_synth_level(ll, dense_s[:h2, h2:],
                           dense_s[h2:, :h2], dense_s[h2:, h2:])
    return ll


# ---------------------------------------------------------------------------
# Module-equivalent forward (active-adapter path)
# ---------------------------------------------------------------------------
@jax.jit
def fourier_linear_forward(x, W, b, spectrum, idx_rows, idx_cols):
    """result = x @ W.T + b + einsum('ijk,kl->ijl', x, delta_w)
       with delta_w = IDWT_haar_J3(packed dense spectrum) / 10.

    The adapter is folded into the base weight, stored K-major for the kernel:
      W_eff_kn[k, n] = W[n, k] + delta_w[k, n]
    built in one fused transpose + add + bf16-cast pass (no extra weight-sized
    HBM round trips, no transposed RHS inside the kernel).

    NOTE: folding the delta before the bf16 cast absorbs adapter components
    smaller than |W|*2^-9 into bf16 rounding; keep a separate f32 adapter
    matmul if that fidelity matters.
    """
    out_features, in_features = W.shape
    if out_features != in_features:
        raise ValueError("adapter fold requires out_features == in_features")
    if in_features % 8 != 0:
        raise ValueError("packed J=3 Haar layout requires in_features % 8 == 0")

    dense_s = (jnp.zeros((in_features, in_features), jnp.float32)
               .at[idx_rows, idx_cols].set(spectrum.astype(jnp.float32)))
    delta_w = packed_idwt_j3(dense_s) / 10.0                         # (K, N)
    w_eff_kn = (W.astype(jnp.float32).T + delta_w).astype(jnp.bfloat16)

    B, S, K = x.shape
    out2d = fused_linear_bias(x.reshape(B * S, K), w_eff_kn, b, out_dtype=x.dtype)
    return out2d.reshape(B, S, -1)
    # TODO(synk): disable_adapters / merge / unmerge branches and fp16/bf16
    # dtype bookkeeping are runtime state management, not compute; only the
    # active-adapter path is kernelized.


if __name__ == "__main__":
    key = jax.random.PRNGKey(0)
    B, S = 2, 8
    in_features = out_features = 256   # must be equal (adapter fold) and %8==0 (J=3 Haar)
    n_frequency = 64
    scale = 0.1                        # defined but unused in forward (matches reference)

    k_x, k_w, k_b, k_spec, k_idx = jax.random.split(key, 5)
    x = jax.random.normal(k_x, (B, S, in_features), dtype=jnp.float32)
    W = jax.random.normal(k_w, (out_features, in_features), dtype=jnp.float32) * 0.05
    bias = jax.random.normal(k_b, (out_features,), dtype=jnp.float32) * 0.01
    spectrum = jax.random.normal(k_spec, (n_frequency,), dtype=jnp.float32)
    perm = jax.random.permutation(k_idx, in_features * in_features)[:n_frequency]
    idx_rows = perm // in_features
    idx_cols = perm % in_features

    out = fourier_linear_forward(x, W, bias, spectrum, idx_rows, idx_cols)
    jax.block_until_ready(out)

    # --- pure-JAX references ------------------------------------------------
    dense_s = (jnp.zeros((in_features, in_features), jnp.float32)
               .at[idx_rows, idx_cols].set(spectrum))
    delta_w = packed_idwt_j3(dense_s) / 10.0
    # Exact module semantics (full f32).
    ref_f32 = x @ W.T + bias + jnp.einsum('ijk,kl->ijl', x, delta_w)
    # Reference matching the kernel's bf16-input / f32-accumulation numerics.
    w_eff_kn = (W.T + delta_w).astype(jnp.bfloat16).astype(jnp.float32)
    ref_bf16 = (x.reshape(-1, in_features).astype(jnp.bfloat16).astype(jnp.float32)
                @ w_eff_kn + bias).reshape(B, S, out_features)

    assert out.shape == (B, S, out_features)
    assert jnp.allclose(out, ref_bf16, atol=1e-4, rtol=1e-4)   # same casts, tight
    assert jnp.allclose(out, ref_f32, atol=5e-2, rtol=5e-2)    # bf16 quantization slack

    print("KERNEL_OK")
</pallas_src>

<mosaic_0001>
module attributes {stable_mosaic.version = 11 : i64} {
  func.func @_matmul_bias_kernel(%arg0: i32, %arg1: i32, %arg2: i32, %arg3: memref<16x256xbf16, #tpu.memory_space<vmem>>, %arg4: memref<256x128xbf16, #tpu.memory_space<vmem>>, %arg5: memref<1x128xf32, #tpu.memory_space<vmem>>, %arg6: memref<16x128xf32, #tpu.memory_space<vmem>>, %arg7: memref<16x128xf32, #tpu.memory_space<vmem>>) attributes {dimension_semantics = [#tpu.dimension_semantics<parallel>, #tpu.dimension_semantics<parallel>, #tpu.dimension_semantics<arbitrary>], iteration_bounds = array<i64: 1, 2, 1>, scalar_prefetch = 0 : i64, scratch_operands = 1 : i64, tpu.core_type = #tpu.core_type<tc>, window_params = [{transform_indices = @transform_0, window_bounds = array<i64: 16, 256>}, {transform_indices = @transform_1, window_bounds = array<i64: 256, 128>}, {transform_indices = @transform_2, window_bounds = array<i64: 1, 128>}, {transform_indices = @transform_3, window_bounds = array<i64: 16, 128>}]} {
    %c0_i32 = arith.constant 0 : i32
    %0 = arith.cmpi eq, %arg2, %c0_i32 : i32
    %1 = arith.extui %0 : i1 to i32
    %c0_i32_0 = arith.constant 0 : i32
    %2 = arith.cmpi ne, %1, %c0_i32_0 : i32
    scf.if %2 {
      %cst_10 = arith.constant 0.000000e+00 : f32
      %12 = vector.broadcast %cst_10 : f32 to vector<16x128xf32>
      %c0_11 = arith.constant 0 : index
      %c0_12 = arith.constant 0 : index
      %13 = vector.load %arg7[%c0_11, %c0_12] : memref<16x128xf32, #tpu.memory_space<vmem>>, vector<16x128xf32>
      tpu.vector_store %arg7[%c0_11, %c0_12], %12 {strides = array<i32>} : memref<16x128xf32, #tpu.memory_space<vmem>>, vector<16x128xf32>,
    } else {
    }
    %c0 = arith.constant 0 : index
    %c0_1 = arith.constant 0 : index
    %3 = vector.load %arg7[%c0, %c0_1] : memref<16x128xf32, #tpu.memory_space<vmem>>, vector<16x128xf32>
    %c0_2 = arith.constant 0 : index
    %c0_3 = arith.constant 0 : index
    %4 = vector.load %arg3[%c0_2, %c0_3] : memref<16x256xbf16, #tpu.memory_space<vmem>>, vector<16x256xbf16>
    %c0_4 = arith.constant 0 : index
    %c0_5 = arith.constant 0 : index
    %5 = vector.load %arg4[%c0_4, %c0_5] : memref<256x128xbf16, #tpu.memory_space<vmem>>, vector<256x128xbf16>
    %cst = arith.constant dense<0.000000e+00> : vector<16x128xf32>
    %6 = tpu.matmul %4, %5, %cst {dimension_numbers = #tpu.dot_dimension_numbers<[1], [0], [0], [1], [0, 0, 1, 1], [], []>} : vector<16x256xbf16>, vector<256x128xbf16>, vector<16x128xf32> -> vector<16x128xf32>
    %7 = arith.addf %3, %6 : vector<16x128xf32>
    %c0_6 = arith.constant 0 : index
    %c0_7 = arith.constant 0 : index
    %8 = vector.load %arg7[%c0_6, %c0_7] : memref<16x128xf32, #tpu.memory_space<vmem>>, vector<16x128xf32>
    tpu.vector_store %arg7[%c0_6, %c0_7], %7 {strides = array<i32>} : memref<16x128xf32, #tpu.memory_space<vmem>>, vector<16x128xf32>,
    %c0_i32_8 = arith.constant 0 : i32
    %9 = arith.cmpi eq, %arg2, %c0_i32_8 : i32
    %10 = arith.extui %9 : i1 to i32
    %c0_i32_9 = arith.constant 0 : i32
    %11 = arith.cmpi ne, %10, %c0_i32_9 : i32
    scf.if %11 {
      %c0_10 = arith.constant 0 : index
      %c0_11 = arith.constant 0 : index
      %12 = vector.load %arg7[%c0_10, %c0_11] : memref<16x128xf32, #tpu.memory_space<vmem>>, vector<16x128xf32>
      %c0_12 = arith.constant 0 : index
      %c0_13 = arith.constant 0 : index
      %13 = vector.load %arg5[%c0_12, %c0_13] : memref<1x128xf32, #tpu.memory_space<vmem>>, vector<1x128xf32>
      %14 = vector.broadcast %13 : vector<1x128xf32> to vector<16x128xf32>
      %15 = arith.addf %12, %14 : vector<16x128xf32>
      %c0_14 = arith.constant 0 : index
      %c0_15 = arith.constant 0 : index
      %16 = vector.load %arg6[%c0_14, %c0_15] : memref<16x128xf32, #tpu.memory_space<vmem>>, vector<16x128xf32>
      tpu.vector_store %arg6[%c0_14, %c0_15], %15 {strides = array<i32>} : memref<16x128xf32, #tpu.memory_space<vmem>>, vector<16x128xf32>,
    } else {
    }
    return
  }
  func.func @transform_0(%arg0: i32, %arg1: i32, %arg2: i32) -> (i32, i32) {
    %c0_i32 = arith.constant 0 : i32
    return %arg0, %arg2 : i32, i32
  }
  func.func @transform_1(%arg0: i32, %arg1: i32, %arg2: i32) -> (i32, i32) {
    %c0_i32 = arith.constant 0 : i32
    return %arg2, %arg1 : i32, i32
  }
  func.func @transform_2(%arg0: i32, %arg1: i32, %arg2: i32) -> (i32, i32) {
    %c0_i32 = arith.constant 0 : i32
    %c0_i32_0 = arith.constant 0 : i32
    return %c0_i32, %arg1 : i32, i32
  }
  func.func @transform_3(%arg0: i32, %arg1: i32, %arg2: i32) -> (i32, i32) {
    %c0_i32 = arith.constant 0 : i32
    return %arg0, %arg1 : i32, i32
  }
}

</mosaic_0001>

<llo_original>
// kernel: fourier_linear_forward.1
$region0: #{fourier_linear_forward.1}
  #allocation0 [shape = 'u32[]', space=smem, size = 0x4, offset = 0x4, fixed_abs, tag = 'smem constant byte address 0x4 - core index']
  #allocation1 [shape = 'u32[144,128]{1,0:T(1,128)}', space=vmem, size = 0x12000, scoped, tag = 'internal scratch']
  #allocation2 [shape = 'f32[16,128]{1,0:T(8,128)}', space=vmem, size = 0x2000, scoped, tag = 'scratch operand']
  %s0 = inlined_call_operand.vmem [shape: bf16[16,256], index: 0, kind: input, shape index: {}]
  %s1 = inlined_call_operand.vmem [shape: bf16[256,256], index: 1, kind: input, shape index: {}]
  %s2 = inlined_call_operand.vmem [shape: f32[1,256], index: 2, kind: input, shape index: {}]
  %s3 = inlined_call_operand.hbm [shape: f32[16,256], index: 3, kind: output, shape index: {}]
  %s4 = sld [smem:[#allocation0]]
  $region94: #{fourier_linear_forward.1} parent=0
    _
  %s6 = ssub.s32 1, %s4
  %s7 = scalar_select 0, %s6, %s4
  $region1: #{fourier_linear_forward.1} parent=0
    #allocation3 [shape = 'u8[131072]{0}', space=vmem, size = 0x20000, scoped, tag = 'input window, operand 1']
    #allocation4 [shape = 'u8[16384]{0}', space=vmem, size = 0x4000, scoped, tag = 'output window, operand 0']
    #allocation5 [shape = 's32[2]{0}', space=sflag, size = 0x8, scoped, tag = 'scoped memory for fourier_linear_forward.1']
    %8 = vsyncpa [#allocation5], 0
    %s9 = scalar_lea.sflag [#allocation5], 1
    %10 = vsyncpa %s9, 0
    loop: start=0, step=1, limit=4
    $region2: #{fourier_linear_forward.1} parent=1 // loop_pre_header
      _
    $region3: #{fourier_linear_forward.1} parent=1 // loop_header
      %s12 = sphi 0, %s16
      %p13 = scmp.ge.s32.totalorder %s12, 4
      %s19 = sphi 0, %s38
      %s20 = sphi 0, %s34
      %s21 = sphi 0, %s30
      %s22 = sphi 0, %s19
      %s23 = sphi 0, %s20
      %s24 = sphi 0, %s21
      %s25 = sphi 0, %s22
      %s26 = sphi 0, %s23
      %s27 = sphi 0, %s24
      %s43 = sphi 0, %s45
      %s46 = sphi 0, %s43
      %s47 = sphi 0, %s46
      %s63 = sphi 0, %s47
      %s71 = sphi 0, %s73
      %s74 = sphi 0, %s71
      %s75 = sphi 0, %s74
      %s91 = sphi 0, %s75
      %s97 = sphi 0, %s99
      %s100 = sphi 0, %s97
      %s101 = sphi 0, %s100
      %s117 = sphi 0, %s101
      %s125 = sphi 0, %s127
      %s128 = sphi 0, %s125
      %s129 = sphi 0, %s128
      %s145 = sphi 0, %s129
    $region4: #{fourier_linear_forward.1} parent=1 // loop_header_branch
      %15 = sbr.rel (%p13) target = $region8
    $region5: #{fourier_linear_forward.1} parent=1 // loop_body
      %s17 = ssub.s32 %s12, 1
      %s18 = ssub.s32 %s12, 2
      %s28 = sadd.s32 1, %s21
      %p29 = scmp.ge.s32.totalorder %s28, 1
      %s30 = scalar_select %p29, 0, %s28
      %s31 = sadd.s32 1, %s20
      %s32 = scalar_select %p29, %s31, %s20
      %p33 = scmp.ge.s32.totalorder %s32, 2
      %s34 = scalar_select %p33, 0, %s32
      %s35 = sadd.s32 1, %s19
      %s36 = scalar_select %p33, %s35, %s19
      %p37 = scmp.ge.s32.totalorder %s36, 1
      %s38 = scalar_select %p37, 0, %s36
      %s39 = ssub.s32 %s19, %s38
      %s40 = ssub.s32 %s21, %s30
      %s41 = sor.u32 %s39, %s40
      %p42 = scmp.eq.s32.totalorder %s41, 0
      %s44 = sadd.s32 %s43, 1
      %s45 = scalar_select %p42, %s43, %s44
      %p48 = pneg %p42
      %p49 = scmp.eq.s32.totalorder %s12, 1
      %p50 = por %p48, %p49
      %p51 = scmp.ne.s32.totalorder %s43, %s46
      %p52 = scmp.eq.s32.totalorder %s12, 0
      %p53 = por %p51, %p52
      %p54 = scmp.ne.s32.totalorder %s43, %s46
      %p55 = scmp.eq.s32.totalorder %s17, 1
      %p56 = por %p54, %p55
      %p57 = scmp.ne.s32.totalorder %s46, %s47
      %p58 = scmp.eq.s32.totalorder %s17, 0
      %p59 = por %p57, %p58
      %p60 = scmp.ne.s32.totalorder %s46, %s47
      %p61 = scmp.eq.s32.totalorder %s18, 1
      %p62 = por %p60, %p61
      %p64 = scmp.ne.s32.totalorder %s47, %s63
      %p65 = scmp.eq.s32.totalorder %s18, 0
      %p66 = por %p64, %p65
      %s67 = ssub.s32 %s21, %s30
      %s68 = ssub.s32 %s20, %s34
      %s69 = sor.u32 %s67, %s68
      %p70 = scmp.eq.s32.totalorder %s69, 0
      %s72 = sadd.s32 %s71, 1
      %s73 = scalar_select %p70, %s71, %s72
      %p76 = pneg %p70
      %p77 = scmp.eq.s32.totalorder %s12, 1
      %p78 = por %p76, %p77
      %p79 = scmp.ne.s32.totalorder %s71, %s74
      %p80 = scmp.eq.s32.totalorder %s12, 0
      %p81 = por %p79, %p80
      %p82 = scmp.ne.s32.totalorder %s71, %s74
      %p83 = scmp.eq.s32.totalorder %s17, 1
      %p84 = por %p82, %p83
      %p85 = scmp.ne.s32.totalorder %s74, %s75
      %p86 = scmp.eq.s32.totalorder %s17, 0
      %p87 = por %p85, %p86
      %p88 = scmp.ne.s32.totalorder %s74, %s75
      %p89 = scmp.eq.s32.totalorder %s18, 1
      %p90 = por %p88, %p89
      %p92 = scmp.ne.s32.totalorder %s75, %s91
      %p93 = scmp.eq.s32.totalorder %s18, 0
      %p94 = por %p92, %p93
      %s95 = ssub.s32 %s20, %s34
      %p96 = scmp.eq.s32.totalorder %s95, 0
      %s98 = sadd.s32 %s97, 1
      %s99 = scalar_select %p96, %s97, %s98
      %p102 = pneg %p96
      %p103 = scmp.eq.s32.totalorder %s12, 1
      %p104 = por %p102, %p103
      %p105 = scmp.ne.s32.totalorder %s97, %s100
      %p106 = scmp.eq.s32.totalorder %s12, 0
      %p107 = por %p105, %p106
      %p108 = scmp.ne.s32.totalorder %s97, %s100
      %p109 = scmp.eq.s32.totalorder %s17, 1
      %p110 = por %p108, %p109
      %p111 = scmp.ne.s32.totalorder %s100, %s101
      %p112 = scmp.eq.s32.totalorder %s17, 0
      %p113 = por %p111, %p112
      %p114 = scmp.ne.s32.totalorder %s100, %s101
      %p115 = scmp.eq.s32.totalorder %s18, 1
      %p116 = por %p114, %p115
      %p118 = scmp.ne.s32.totalorder %s101, %s117
      %p119 = scmp.eq.s32.totalorder %s18, 0
      %p120 = por %p118, %p119
      %s121 = ssub.s32 %s19, %s38
      %s122 = ssub.s32 %s20, %s34
      %s123 = sor.u32 %s121, %s122
      %p124 = scmp.eq.s32.totalorder %s123, 0
      %s126 = sadd.s32 %s125, 1
      %s127 = scalar_select %p124, %s125, %s126
      %p130 = pneg %p124
      %p131 = scmp.eq.s32.totalorder %s12, 1
      %p132 = por %p130, %p131
      %p133 = scmp.ne.s32.totalorder %s125, %s128
      %p134 = scmp.eq.s32.totalorder %s12, 0
      %p135 = por %p133, %p134
      %p136 = scmp.ne.s32.totalorder %s125, %s128
      %p137 = scmp.eq.s32.totalorder %s17, 1
      %p138 = por %p136, %p137
      %p139 = scmp.ne.s32.totalorder %s128, %s129
      %p140 = scmp.eq.s32.totalorder %s17, 0
      %p141 = por %p139, %p140
      %p142 = scmp.ne.s32.totalorder %s128, %s129
      %p143 = scmp.eq.s32.totalorder %s18, 1
      %p144 = por %p142, %p143
      %p146 = scmp.ne.s32.totalorder %s129, %s145
      %p147 = scmp.eq.s32.totalorder %s18, 0
      %p148 = por %p146, %p147
      %p149 = scmp.le.s32.totalorder 1, %s12
      %p150 = scmp.lt.s32.totalorder %s12, 3
      %p151 = pnand %p149, %p150
      %p152 = pneg %p151
      // Predicated region
      $region9: #{fourier_linear_forward.1} parent=5 // pred_check
        _
      $region10: #{fourier_linear_forward.1} parent=5 // pred_check_branch
        %154 = sbr.rel (%p151) target = $region12
      $region11: #{fourier_linear_forward.1} parent=5 // pred_region
        %s155 = ssub.s32 %s12, 1
        // Predicated region
        $region13: #{fourier_linear_forward.1} parent=11 // pred_check
          %p156 = pneg %p59
        $region14: #{fourier_linear_forward.1} parent=11 // pred_check_branch
          %158 = sbr.rel (%p156) target = $region16
        $region15: #{fourier_linear_forward.1} parent=11 // pred_region
          %s159 = smul.u32 2, %s22
          %s160 = smul.u32 2, %s24
          %p161 = scmp.lt.s32.totalorder %s159, 1
          %s162 = scalar_select %p161, %s159, 1
          %p163 = scmp.lt.s32.totalorder %s160, 1
          %s164 = scalar_select %p163, %s160, 1
          %s165 = smul.addr %s162, 2
          %s166 = sadd.s32 %s164, %s165
          %s167 = smul.addr %s166, 4
          %s168 = scalar_lea.vmem %s0, %s167
          %s169 = smul.u32 2, %s22
          %s170 = smul.u32 2, %s24
        $region16: #{fourier_linear_forward.1} parent=11 // pred_fallthru
          _
      $region12: #{fourier_linear_forward.1} parent=5 // pred_fallthru
        _
      %p171 = scmp.lt.s32.totalorder %s12, 2
      // Predicated region
      $region17: #{fourier_linear_forward.1} parent=5 // pred_check
        %p172 = pneg %p171
      $region18: #{fourier_linear_forward.1} parent=5 // pred_check_branch
        %174 = sbr.rel (%p172) target = $region20
      $region19: #{fourier_linear_forward.1} parent=5 // pred_region
        // Predicated region
        $region21: #{fourier_linear_forward.1} parent=19 // pred_check
          %p175 = pneg %p81
        $region22: #{fourier_linear_forward.1} parent=19 // pred_check_branch
          %177 = sbr.rel (%p175) target = $region24
        $region23: #{fourier_linear_forward.1} parent=19 // pred_region
          %s178 = sand.u32 %s71, 1
          %s179 = sand.u32 %s71, 1
          %s180 = smul.addr %s179, 128
          %s181 = scalar_lea.vmem [#allocation3], %s180
          %s182 = smul.u32 32, %s21
          %s183 = smul.addr %s182, 2
          %s184 = sadd.s32 %s20, %s183
          %s185 = smul.addr %s184, 4
          %s186 = scalar_lea.vmem %s1, %s185
          // Predicated region
          $region25: #{fourier_linear_forward.1} parent=23 // pred_check
            _
          $region26: #{fourier_linear_forward.1} parent=23 // pred_check_branch
            %188 = sbr.rel (0) target = $region28
          $region27: #{fourier_linear_forward.1} parent=23 // pred_region
            // Predicated region
            $region29: #{fourier_linear_forward.1} parent=27 // pred_check
              _
            $region30: #{fourier_linear_forward.1} parent=27 // pred_check_branch
              %190 = sbr.rel target = $region32
            $region31: #{fourier_linear_forward.1} parent=27 // pred_region
              // Predicated region
              $region44: #{fourier_linear_forward.1} parent=31 // pred_check
                _
              $region45: #{fourier_linear_forward.1} parent=31 // pred_check_branch
                %267 = sbr.rel (0) target = $region47
              $region46: #{fourier_linear_forward.1} parent=31 // pred_region
                loop: start=0, step=1, limit=1
                $region48: #{fourier_linear_forward.1} parent=46 // loop_pre_header
                  _
                $region49: #{fourier_linear_forward.1} parent=46 // loop_header
                  %s269 = sphi 0, %s273
                  %p270 = scmp.ge.s32.totalorder %s269, 1
                  %s274 = sphi %s186, %s186
                  %s275 = sphi %s181, %s181
                $region50: #{fourier_linear_forward.1} parent=46 // loop_header_branch
                  %272 = sbr.rel (%p270) target = $region54
                $region51: #{fourier_linear_forward.1} parent=46 // loop_body
                  _
                $region52: #{fourier_linear_forward.1} parent=46 // loop_footer
                  %s273 = sadd.s32 1, %s269
                $region53: #{fourier_linear_forward.1} parent=46 // loop_footer_branch
                  %268 = sbr.rel target = $region49
                $region54: #{fourier_linear_forward.1} parent=46 // loop_exit
                  _
                loop: start=0, step=1, limit=1
                $region55: #{fourier_linear_forward.1} parent=46 // loop_pre_header
                  _
                $region56: #{fourier_linear_forward.1} parent=46 // loop_header
                  %s278 = sphi 0, %s282
                  %p279 = scmp.ge.s32.totalorder %s278, 1
                  %s283 = sphi %s186, %s186
                  %s284 = sphi %s181, %s181
                $region57: #{fourier_linear_forward.1} parent=46 // loop_header_branch
                  %281 = sbr.rel (%p279) target = $region61
                $region58: #{fourier_linear_forward.1} parent=46 // loop_body
                  %v285 = vld [vmem:[%s283] sm:$0xf]
                  %286 = vst [vmem:[%s284] sm:$0xf] %v285
                  %v287 = vld [vmem:[%s283 + $0x8] sm:$0xf]
                  %288 = vst [vmem:[%s284 + $0x4] sm:$0xf] %v287
                  %v289 = vld [vmem:[%s283 + $0x10] sm:$0xf]
                  %290 = vst [vmem:[%s284 + $0x8] sm:$0xf] %v289
                  %v291 = vld [vmem:[%s283 + $0x18] sm:$0xf]
                  %292 = vst [vmem:[%s284 + $0xc] sm:$0xf] %v291
                  %v293 = vld [vmem:[%s283 + $0x20] sm:$0xf]
                  %294 = vst [vmem:[%s284 + $0x10] sm:$0xf] %v293
                  %v295 = vld [vmem:[%s283 + $0x28] sm:$0xf]
                  %296 = vst [vmem:[%s284 + $0x14] sm:$0xf] %v295
                  %v297 = vld [vmem:[%s283 + $0x30] sm:$0xf]
                  %298 = vst [vmem:[%s284 + $0x18] sm:$0xf] %v297
                  %v299 = vld [vmem:[%s283 + $0x38] sm:$0xf]
                  %300 = vst [vmem:[%s284 + $0x1c] sm:$0xf] %v299
                  %v301 = vld [vmem:[%s283 + $0x40] sm:$0xf]
                  %302 = vst [vmem:[%s284 + $0x20] sm:$0xf] %v301
                  %v303 = vld [vmem:[%s283 + $0x48] sm:$0xf]
                  %304 = vst [vmem:[%s284 + $0x24] sm:$0xf] %v303
                  %v305 = vld [vmem:[%s283 + $0x50] sm:$0xf]
                  %306 = vst [vmem:[%s284 + $0x28] sm:$0xf] %v305
                  %v307 = vld [vmem:[%s283 + $0x58] sm:$0xf]
                  %308 = vst [vmem:[%s284 + $0x2c] sm:$0xf] %v307
                  %v309 = vld [vmem:[%s283 + $0x60] sm:$0xf]
                  %310 = vst [vmem:[%s284 + $0x30] sm:$0xf] %v309
                  %v311 = vld [vmem:[%s283 + $0x68] sm:$0xf]
                  %312 = vst [vmem:[%s284 + $0x34] sm:$0xf] %v311
                  %v313 = vld [vmem:[%s283 + $0x70] sm:$0xf]
                  %314 = vst [vmem:[%s284 + $0x38] sm:$0xf] %v313
                  %v315 = vld [vmem:[%s283 + $0x78] sm:$0xf]
                  %316 = vst [vmem:[%s284 + $0x3c] sm:$0xf] %v315
                  %v317 = vld [vmem:[%s283 + $0x80] sm:$0xf]
                  %318 = vst [vmem:[%s284 + $0x40] sm:$0xf] %v317
                  %v319 = vld [vmem:[%s283 + $0x88] sm:$0xf]
                  %320 = vst [vmem:[%s284 + $0x44] sm:$0xf] %v319
                  %v321 = vld [vmem:[%s283 + $0x90] sm:$0xf]
                  %322 = vst [vmem:[%s284 + $0x48] sm:$0xf] %v321
                  %v323 = vld [vmem:[%s283 + $0x98] sm:$0xf]
                  %324 = vst [vmem:[%s284 + $0x4c] sm:$0xf] %v323
                  %v325 = vld [vmem:[%s283 + $0xa0] sm:$0xf]
                  %326 = vst [vmem:[%s284 + $0x50] sm:$0xf] %v325
                  %v327 = vld [vmem:[%s283 + $0xa8] sm:$0xf]
                  %328 = vst [vmem:[%s284 + $0x54] sm:$0xf] %v327
                  %v329 = vld [vmem:[%s283 + $0xb0] sm:$0xf]
                  %330 = vst [vmem:[%s284 + $0x58] sm:$0xf] %v329
                  %v331 = vld [vmem:[%s283 + $0xb8] sm:$0xf]
                  %332 = vst [vmem:[%s284 + $0x5c] sm:$0xf] %v331
                  %v333 = vld [vmem:[%s283 + $0xc0] sm:$0xf]
                  %334 = vst [vmem:[%s284 + $0x60] sm:$0xf] %v333
                  %v335 = vld [vmem:[%s283 + $0xc8] sm:$0xf]
                  %336 = vst [vmem:[%s284 + $0x64] sm:$0xf] %v335
                  %v337 = vld [vmem:[%s283 + $0xd0] sm:$0xf]
                  %338 = vst [vmem:[%s284 + $0x68] sm:$0xf] %v337
                  %v339 = vld [vmem:[%s283 + $0xd8] sm:$0xf]
                  %340 = vst [vmem:[%s284 + $0x6c] sm:$0xf] %v339
                  %v341 = vld [vmem:[%s283 + $0xe0] sm:$0xf]
                  %342 = vst [vmem:[%s284 + $0x70] sm:$0xf] %v341
                  %v343 = vld [vmem:[%s283 + $0xe8] sm:$0xf]
                  %344 = vst [vmem:[%s284 + $0x74] sm:$0xf] %v343
                  %v345 = vld [vmem:[%s283 + $0xf0] sm:$0xf]
                  %346 = vst [vmem:[%s284 + $0x78] sm:$0xf] %v345
                  %v347 = vld [vmem:[%s283 + $0xf8] sm:$0xf]
                  %348 = vst [vmem:[%s284 + $0x7c] sm:$0xf] %v347
                $region59: #{fourier_linear_forward.1} parent=46 // loop_footer
                  %s282 = sadd.s32 1, %s278
                $region60: #{fourier_linear_forward.1} parent=46 // loop_footer_branch
                  %277 = sbr.rel target = $region56
                $region61: #{fourier_linear_forward.1} parent=46 // loop_exit
                  _
              $region47: #{fourier_linear_forward.1} parent=31 // pred_fallthru
                _
            $region32: #{fourier_linear_forward.1} parent=27 // pred_fallthru
              _
            // Predicated region
            $region33: #{fourier_linear_forward.1} parent=27 // pred_check
              _
            $region34: #{fourier_linear_forward.1} parent=27 // pred_check_branch
              %192 = sbr.rel (0) target = $region36
            $region35: #{fourier_linear_forward.1} parent=27 // pred_region
              loop: start=0, step=1, limit=1
              $region37: #{fourier_linear_forward.1} parent=35 // loop_pre_header
                _
              $region38: #{fourier_linear_forward.1} parent=35 // loop_header
                %s195 = sphi 0, %s199
                %p196 = scmp.ge.s32.totalorder %s195, 1
                %s200 = sphi %s186, %s186
                %s201 = sphi %s181, %s181
              $region39: #{fourier_linear_forward.1} parent=35 // loop_header_branch
                %198 = sbr.rel (%p196) target = $region43
              $region40: #{fourier_linear_forward.1} parent=35 // loop_body
                %v202 = vld [vmem:[%s200] sm:$0xf]
                %203 = vst [vmem:[%s201] sm:$0xf] %v202
                %v204 = vld [vmem:[%s200 + $0x8] sm:$0xf]
                %205 = vst [vmem:[%s201 + $0x4] sm:$0xf] %v204
                %v206 = vld [vmem:[%s200 + $0x10] sm:$0xf]
                %207 = vst [vmem:[%s201 + $0x8] sm:$0xf] %v206
                %v208 = vld [vmem:[%s200 + $0x18] sm:$0xf]
                %209 = vst [vmem:[%s201 + $0xc] sm:$0xf] %v208
                %v210 = vld [vmem:[%s200 + $0x20] sm:$0xf]
                %211 = vst [vmem:[%s201 + $0x10] sm:$0xf] %v210
                %v212 = vld [vmem:[%s200 + $0x28] sm:$0xf]
                %213 = vst [vmem:[%s201 + $0x14] sm:$0xf] %v212
                %v214 = vld [vmem:[%s200 + $0x30] sm:$0xf]
                %215 = vst [vmem:[%s201 + $0x18] sm:$0xf] %v214
                %v216 = vld [vmem:[%s200 + $0x38] sm:$0xf]
                %217 = vst [vmem:[%s201 + $0x1c] sm:$0xf] %v216
                %v218 = vld [vmem:[%s200 + $0x40] sm:$0xf]
                %219 = vst [vmem:[%s201 + $0x20] sm:$0xf] %v218
                %v220 = vld [vmem:[%s200 + $0x48] sm:$0xf]
                %221 = vst [vmem:[%s201 + $0x24] sm:$0xf] %v220
                %v222 = vld [vmem:[%s200 + $0x50] sm:$0xf]
                %223 = vst [vmem:[%s201 + $0x28] sm:$0xf] %v222
                %v224 = vld [vmem:[%s200 + $0x58] sm:$0xf]
                %225 = vst [vmem:[%s201 + $0x2c] sm:$0xf] %v224
                %v226 = vld [vmem:[%s200 + $0x60] sm:$0xf]
                %227 = vst [vmem:[%s201 + $0x30] sm:$0xf] %v226
                %v228 = vld [vmem:[%s200 + $0x68] sm:$0xf]
                %229 = vst [vmem:[%s201 + $0x34] sm:$0xf] %v228
                %v230 = vld [vmem:[%s200 + $0x70] sm:$0xf]
                %231 = vst [vmem:[%s201 + $0x38] sm:$0xf] %v230
                %v232 = vld [vmem:[%s200 + $0x78] sm:$0xf]
                %233 = vst [vmem:[%s201 + $0x3c] sm:$0xf] %v232
                %v234 = vld [vmem:[%s200 + $0x80] sm:$0xf]
                %235 = vst [vmem:[%s201 + $0x40] sm:$0xf] %v234
                %v236 = vld [vmem:[%s200 + $0x88] sm:$0xf]
                %237 = vst [vmem:[%s201 + $0x44] sm:$0xf] %v236
                %v238 = vld [vmem:[%s200 + $0x90] sm:$0xf]
                %239 = vst [vmem:[%s201 + $0x48] sm:$0xf] %v238
                %v240 = vld [vmem:[%s200 + $0x98] sm:$0xf]
                %241 = vst [vmem:[%s201 + $0x4c] sm:$0xf] %v240
                %v242 = vld [vmem:[%s200 + $0xa0] sm:$0xf]
                %243 = vst [vmem:[%s201 + $0x50] sm:$0xf] %v242
                %v244 = vld [vmem:[%s200 + $0xa8] sm:$0xf]
                %245 = vst [vmem:[%s201 + $0x54] sm:$0xf] %v244
                %v246 = vld [vmem:[%s200 + $0xb0] sm:$0xf]
                %247 = vst [vmem:[%s201 + $0x58] sm:$0xf] %v246
                %v248 = vld [vmem:[%s200 + $0xb8] sm:$0xf]
                %249 = vst [vmem:[%s201 + $0x5c] sm:$0xf] %v248
                %v250 = vld [vmem:[%s200 + $0xc0] sm:$0xf]
                %251 = vst [vmem:[%s201 + $0x60] sm:$0xf] %v250
                %v252 = vld [vmem:[%s200 + $0xc8] sm:$0xf]
                %253 = vst [vmem:[%s201 + $0x64] sm:$0xf] %v252
                %v254 = vld [vmem:[%s200 + $0xd0] sm:$0xf]
                %255 = vst [vmem:[%s201 + $0x68] sm:$0xf] %v254
                %v256 = vld [vmem:[%s200 + $0xd8] sm:$0xf]
                %257 = vst [vmem:[%s201 + $0x6c] sm:$0xf] %v256
                %v258 = vld [vmem:[%s200 + $0xe0] sm:$0xf]
                %259 = vst [vmem:[%s201 + $0x70] sm:$0xf] %v258
                %v260 = vld [vmem:[%s200 + $0xe8] sm:$0xf]
                %261 = vst [vmem:[%s201 + $0x74] sm:$0xf] %v260
                %v262 = vld [vmem:[%s200 + $0xf0] sm:$0xf]
                %263 = vst [vmem:[%s201 + $0x78] sm:$0xf] %v262
                %v264 = vld [vmem:[%s200 + $0xf8] sm:$0xf]
                %265 = vst [vmem:[%s201 + $0x7c] sm:$0xf] %v264
              $region41: #{fourier_linear_forward.1} parent=35 // loop_footer
                %s199 = sadd.s32 1, %s195
              $region42: #{fourier_linear_forward.1} parent=35 // loop_footer_branch
                %194 = sbr.rel target = $region38
              $region43: #{fourier_linear_forward.1} parent=35 // loop_exit
                _
            $region36: #{fourier_linear_forward.1} parent=27 // pred_fallthru
              _
          $region28: #{fourier_linear_forward.1} parent=23 // pred_fallthru
            _
          %349 = vnop
        $region24: #{fourier_linear_forward.1} parent=19 // pred_fallthru
          _
        // Predicated region
        $region62: #{fourier_linear_forward.1} parent=19 // pred_check
          %p350 = pneg %p107
        $region63: #{fourier_linear_forward.1} parent=19 // pred_check_branch
          %352 = sbr.rel (%p350) target = $region65
        $region64: #{fourier_linear_forward.1} parent=19 // pred_region
          %p353 = scmp.lt.s32.totalorder %s20, 1
          %s354 = scalar_select %p353, %s20, 1
          %s355 = scalar_lea.vmem %s2, %s354
        $region65: #{fourier_linear_forward.1} parent=19 // pred_fallthru
          _
      $region20: #{fourier_linear_forward.1} parent=5 // pred_fallthru
        _
      %p356 = scmp.le.s32.totalorder 1, %s12
      %p357 = scmp.lt.s32.totalorder %s12, 3
      %p358 = pnand %p356, %p357
      %p359 = pneg %p358
      // Predicated region
      $region66: #{fourier_linear_forward.1} parent=5 // pred_check
        _
      $region67: #{fourier_linear_forward.1} parent=5 // pred_check_branch
        %361 = sbr.rel (%p358) target = $region69
      $region68: #{fourier_linear_forward.1} parent=5 // pred_region
        %s362 = ssub.s32 %s12, 1
        %s363 = sand.u32 %s74, 1
        %s364 = sand.u32 %s74, 1
        %s365 = smul.addr %s364, 128
        %s366 = scalar_lea.vmem [#allocation3], %s365
        // Predicated region
        $region70: #{fourier_linear_forward.1} parent=68 // pred_check
          %p367 = pneg %p87
        $region71: #{fourier_linear_forward.1} parent=68 // pred_check_branch
          %369 = sbr.rel (%p367) target = $region73
        $region72: #{fourier_linear_forward.1} parent=68 // pred_region
          _
        $region73: #{fourier_linear_forward.1} parent=68 // pred_fallthru
          _
        %s370 = smul.u32 2, %s22
        %s371 = smul.u32 2, %s24
        %p372 = scmp.lt.s32.totalorder %s370, 1
        %s373 = scalar_select %p372, %s370, 1
        %p374 = scmp.lt.s32.totalorder %s371, 1
        %s375 = scalar_select %p374, %s371, 1
        %s376 = smul.addr %s373, 2
        %s377 = sadd.s32 %s375, %s376
        %s378 = smul.addr %s377, 4
        %s379 = scalar_lea.vmem %s0, %s378
        %p380 = pneg %p59
        %p381 = pneg %p56
        %s382 = sand.u32 %s74, 1
        %s383 = sand.u32 %s74, 1
        %s384 = smul.addr %s383, 128
        %s385 = scalar_lea.vmem [#allocation3], %s384
        %p386 = pneg %p87
        %p387 = pneg %p84
        %p388 = scmp.lt.s32.totalorder %s23, 1
        %s389 = scalar_select %p388, %s23, 1
        %s390 = scalar_lea.vmem %s2, %s389
        %p391 = pneg %p113
        %p392 = pneg %p110
        %p393 = pneg %p141
        %p394 = pneg %p138
        %s395 = sand.u32 %s128, 1
        %s396 = scalar_lea.sflag [#allocation5], %s395
        %s397 = sand.u32 %s128, 1
        %s398 = smul.addr %s397, 16
        %s399 = scalar_lea.vmem [#allocation4], %s398
        %s400 = smul.u32 2, %s22
        %s401 = smul.u32 2, %s24
        %p402 = scmp.lt.s32.totalorder %s400, 1
        %s403 = scalar_select %p402, %s400, 1
        %p404 = scmp.lt.s32.totalorder %s401, 1
        %s405 = scalar_select %p404, %s401, 1
        %s406 = smul.addr %s403, 2
        %s407 = sadd.s32 %s405, %s406
        %s408 = smul.addr %s407, 4
        %s409 = scalar_lea.vmem %s0, %s408
        %s410 = smul.u32 2, %s22
        %s411 = smul.u32 2, %s24
        %s412 = smul.u32 32, %s24
        %p413 = scmp.lt.s32.totalorder %s23, 1
        %s414 = scalar_select %p413, %s23, 1
        %s415 = scalar_lea.vmem %s2, %s414
        %s416 = smul.u32 2, %s22
        %p418 = scmp.eq.s32.totalorder %s24, 0
        // Predicated region
        $region74: #{fourier_linear_forward.1} parent=68 // pred_check
          %p419 = pneg %p418
        $region75: #{fourier_linear_forward.1} parent=68 // pred_check_branch
          %421 = sbr.rel (%p419) target = $region77
        $region76: #{fourier_linear_forward.1} parent=68 // pred_region
          %422 = vst [vmem:[#allocation2] sm:$0xff] 0.0
          %423 = vst [vmem:[#allocation2 + $0x8] sm:$0xff] 0.0
        $region77: #{fourier_linear_forward.1} parent=68 // pred_fallthru
          _
        %v424 = vld [vmem:[#allocation2] sm:$0xff]
        %v425 = vld [vmem:[#allocation2 + $0x8] sm:$0xff]
        %v426 = vld [vmem:[%s409] sm:$0xff]
        %v427 = vld [vmem:[%s409 + $0x8] sm:$0xff]
        %v428 = vld [vmem:[%s366] sm:$0xf]
        %v429 = vld [vmem:[%s366 + $0x4] sm:$0xf]
        %v430 = vld [vmem:[%s366 + $0x8] sm:$0xf]
        %v431 = vld [vmem:[%s366 + $0xc] sm:$0xf]
        %v432 = vld [vmem:[%s366 + $0x10] sm:$0xf]
        %v433 = vld [vmem:[%s366 + $0x14] sm:$0xf]
        %v434 = vld [vmem:[%s366 + $0x18] sm:$0xf]
        %v435 = vld [vmem:[%s366 + $0x1c] sm:$0xf]
        %v436 = vld [vmem:[%s366 + $0x20] sm:$0xf]
        %v437 = vld [vmem:[%s366 + $0x24] sm:$0xf]
        %v438 = vld [vmem:[%s366 + $0x28] sm:$0xf]
        %v439 = vld [vmem:[%s366 + $0x2c] sm:$0xf]
        %v440 = vld [vmem:[%s366 + $0x30] sm:$0xf]
        %v441 = vld [vmem:[%s366 + $0x34] sm:$0xf]
        %v442 = vld [vmem:[%s366 + $0x38] sm:$0xf]
        %v443 = vld [vmem:[%s366 + $0x3c] sm:$0xf]
        %v444 = vld [vmem:[%s366 + $0x40] sm:$0xf]
        %v445 = vld [vmem:[%s366 + $0x44] sm:$0xf]
        %v446 = vld [vmem:[%s366 + $0x48] sm:$0xf]
        %v447 = vld [vmem:[%s366 + $0x4c] sm:$0xf]
        %v448 = vld [vmem:[%s366 + $0x50] sm:$0xf]
        %v449 = vld [vmem:[%s366 + $0x54] sm:$0xf]
        %v450 = vld [vmem:[%s366 + $0x58] sm:$0xf]
        %v451 = vld [vmem:[%s366 + $0x5c] sm:$0xf]
        %v452 = vld [vmem:[%s366 + $0x60] sm:$0xf]
        %v453 = vld [vmem:[%s366 + $0x64] sm:$0xf]
        %v454 = vld [vmem:[%s366 + $0x68] sm:$0xf]
        %v455 = vld [vmem:[%s366 + $0x6c] sm:$0xf]
        %v456 = vld [vmem:[%s366 + $0x70] sm:$0xf]
        %v457 = vld [vmem:[%s366 + $0x74] sm:$0xf]
        %v458 = vld [vmem:[%s366 + $0x78] sm:$0xf]
        %v459 = vld [vmem:[%s366 + $0x7c] sm:$0xf]
        %v462 = vunpack.c.l.b16 %v426
        %v463 = vunpack.c.h.b16 %v426
        %v464 = vunpack.c.l.b16 %v427
        %v465 = vunpack.c.h.b16 %v427
        %v466 = vpack.c.b16 %v464, %v462
        %v467 = vpack.c.b16 %v465, %v463
        %v502 = vunpack.c.l.b16 %v428
        %v503 = vunpack.c.l.b16 %v429
        %v504 = vunpack.c.l.b16 %v430
        %v505 = vunpack.c.l.b16 %v431
        %v506 = vunpack.c.l.b16 %v432
        %v507 = vunpack.c.l.b16 %v433
        %v508 = vunpack.c.l.b16 %v434
        %v509 = vunpack.c.l.b16 %v435
        %v510 = vunpack.c.l.b16 %v436
        %v511 = vunpack.c.l.b16 %v437
        %v512 = vunpack.c.l.b16 %v438
        %v513 = vunpack.c.l.b16 %v439
        %v514 = vunpack.c.l.b16 %v440
        %v515 = vunpack.c.l.b16 %v441
        %v516 = vunpack.c.l.b16 %v442
        %v517 = vunpack.c.l.b16 %v443
        %v518 = vunpack.c.l.b16 %v444
        %v519 = vunpack.c.l.b16 %v445
        %v520 = vunpack.c.l.b16 %v446
        %v521 = vunpack.c.l.b16 %v447
        %v522 = vunpack.c.l.b16 %v448
        %v523 = vunpack.c.l.b16 %v449
        %v524 = vunpack.c.l.b16 %v450
        %v525 = vunpack.c.l.b16 %v451
        %v526 = vunpack.c.l.b16 %v452
        %v527 = vunpack.c.l.b16 %v453
        %v528 = vunpack.c.l.b16 %v454
        %v529 = vunpack.c.l.b16 %v455
        %v530 = vunpack.c.l.b16 %v456
        %v531 = vunpack.c.l.b16 %v457
        %v532 = vunpack.c.l.b16 %v458
        %v533 = vunpack.c.l.b16 %v459
        %v534 = vpack.c.b16 %v503, %v502
        %v535 = vpack.c.b16 %v505, %v504
        %v536 = vpack.c.b16 %v507, %v506
        %v537 = vpack.c.b16 %v509, %v508
        %v538 = vpack.c.b16 %v511, %v510
        %v539 = vpack.c.b16 %v513, %v512
        %v540 = vpack.c.b16 %v515, %v514
        %v541 = vpack.c.b16 %v517, %v516
        %v542 = vpack.c.b16 %v519, %v518
        %v543 = vpack.c.b16 %v521, %v520
        %v544 = vpack.c.b16 %v523, %v522
        %v545 = vpack.c.b16 %v525, %v524
        %v546 = vpack.c.b16 %v527, %v526
        %v547 = vpack.c.b16 %v529, %v528
        %v548 = vpack.c.b16 %v531, %v530
        %v549 = vpack.c.b16 %v533, %v532
        %566 = vmatprep.subr.bf16.mxu0 0
        %567 = vmatpush1.bf16.msra.mxu0 %v534
        %568 = vmatprep.subr.bf16.mxu0 0
        %569 = vmatpush1.bf16.msra.mxu0 %v535
        %570 = vmatprep.subr.bf16.mxu0 0
        %571 = vmatpush1.bf16.msra.mxu0 %v536
        %572 = vmatprep.subr.bf16.mxu0 0
        %573 = vmatpush1.bf16.msra.mxu0 %v537
        %574 = vmatprep.subr.bf16.mxu0 0
        %575 = vmatpush1.bf16.msra.mxu0 %v538
        %576 = vmatprep.subr.bf16.mxu0 0
        %577 = vmatpush1.bf16.msra.mxu0 %v539
        %578 = vmatprep.subr.bf16.mxu0 0
        %579 = vmatpush1.bf16.msra.mxu0 %v540
        %580 = vmatprep.subr.bf16.mxu0 0
        %581 = vmatpush1.bf16.msra.mxu0 %v541
        %582 = vmatprep.subr.bf16.mxu0 0
        %583 = vmatpush1.bf16.msra.mxu0 %v542
        %584 = vmatprep.subr.bf16.mxu0 0
        %585 = vmatpush1.bf16.msra.mxu0 %v543
        %586 = vmatprep.subr.bf16.mxu0 0
        %587 = vmatpush1.bf16.msra.mxu0 %v544
        %588 = vmatprep.subr.bf16.mxu0 0
        %589 = vmatpush1.bf16.msra.mxu0 %v545
        %590 = vmatprep.subr.bf16.mxu0 0
        %591 = vmatpush1.bf16.msra.mxu0 %v546
        %592 = vmatprep.subr.bf16.mxu0 0
        %593 = vmatpush1.bf16.msra.mxu0 %v547
        %594 = vmatprep.subr.bf16.mxu0 0
        %595 = vmatpush1.bf16.msra.mxu0 %v548
        %596 = vmatprep.subr.bf16.mxu0 0
        %597 = vmatpush1.bf16.msra.mxu0 %v549
        %598 = vmatprep.mubr.bf16.mxu0 %v467
        %599 = vmatmul.mubr.bf16.gmra.mrb[0].mxu0 %v466
        %v600 = vpop.f32.mrb[0].mxu0
        %v601 = vadd.f32 0.0, %v600
        %v602 = vpop.f32.mrb[0].mxu0
        %v603 = vpop.f32.mrb[0].mxu0
        %v604 = vadd.f32 0.0, %v603
        %v605 = vpop.f32.mrb[0].mxu0
        %606 = vdwg.mxu0
        %v607 = vadd.f32 %v424, %v601
        %v608 = vadd.f32 %v425, %v604
        %609 = vst [vmem:[#allocation2] sm:$0xff] %v607
        %610 = vst [vmem:[#allocation2 + $0x8] sm:$0xff] %v608
        // Predicated region
        $region78: #{fourier_linear_forward.1} parent=68 // pred_check
          %p611 = pneg %p418
        $region79: #{fourier_linear_forward.1} parent=68 // pred_check_branch
          %613 = sbr.rel (%p611) target = $region81
        $region80: #{fourier_linear_forward.1} parent=68 // pred_region
          %v614 = vld [vmem:[#allocation2] sm:$0xff]
          %v615 = vld [vmem:[#allocation2 + $0x8] sm:$0xff]
          %v616 = vld [vmem:[%s415] sm:$0x1]
          %v618 = vlaneseq
          %v619 = vshrl.u32 %v618, 7
          %v620 = vsub.s32 0, %v619
          %v621 = vrot.slane %v616, %v620
          %v623 = vadd.f32 %v614, %v621
          %v624 = vadd.f32 %v615, %v621
          %625 = vst [vmem:[%s399] sm:$0xff] %v623
          %626 = vst [vmem:[%s399 + $0x8] sm:$0xff] %v624
        $region81: #{fourier_linear_forward.1} parent=68 // pred_fallthru
          _
        %s627 = sand.u32 %s128, 1
        %s628 = scalar_lea.sflag [#allocation5], %s627
        %s629 = sand.u32 %s128, 1
        %s630 = smul.addr %s629, 16
        %s631 = scalar_lea.vmem [#allocation4], %s630
        // Predicated region
        $region82: #{fourier_linear_forward.1} parent=68 // pred_check
          %p632 = pneg %p138
        $region83: #{fourier_linear_forward.1} parent=68 // pred_check_branch
          %634 = sbr.rel (%p632) target = $region85
        $region84: #{fourier_linear_forward.1} parent=68 // pred_region
          %s635 = smul.u32 2, %s22
          %s637 = ssub.s32 256, 256
          %638 = vsyncadd %s628, %s637
          %s639 = smul.addr %s635, 2
          %s640 = sadd.s32 %s23, %s639
          %s641 = smul.addr %s640, 128
          %s642 = scalar_lea.hbm %s3, %s641
          %s643 = sshll.u32 %s631, 4
          %s644 = int_to_ptr.vmem [resolvable:$true] %s643
          %649 = dma.vmem_to_hbm [thread:$0]  %s644, 256, %s642, %s628, 128, 256, 8
        $region85: #{fourier_linear_forward.1} parent=68 // pred_fallthru
          _
      $region69: #{fourier_linear_forward.1} parent=5 // pred_fallthru
        _
      %p650 = scmp.le.s32.totalorder 2, %s12
      // Predicated region
      $region86: #{fourier_linear_forward.1} parent=5 // pred_check
        %p651 = pneg %p650
      $region87: #{fourier_linear_forward.1} parent=5 // pred_check_branch
        %653 = sbr.rel (%p651) target = $region89
      $region88: #{fourier_linear_forward.1} parent=5 // pred_region
        %s654 = ssub.s32 %s12, 2
        // Predicated region
        $region90: #{fourier_linear_forward.1} parent=88 // pred_check
          %p655 = pneg %p144
        $region91: #{fourier_linear_forward.1} parent=88 // pred_check_branch
          %657 = sbr.rel (%p655) target = $region93
        $region92: #{fourier_linear_forward.1} parent=88 // pred_region
          %s658 = sand.u32 %s129, 1
          %s659 = scalar_lea.sflag [#allocation5], %s658
          %s660 = sand.u32 %s129, 1
          %s661 = smul.addr %s660, 16
          %s662 = scalar_lea.vmem [#allocation4], %s661
          %663 = dma.done %s659, 256
        $region93: #{fourier_linear_forward.1} parent=88 // pred_fallthru
          _
      $region89: #{fourier_linear_forward.1} parent=5 // pred_fallthru
        _
    $region6: #{fourier_linear_forward.1} parent=1 // loop_footer
      %s16 = sadd.s32 1, %s12
    $region7: #{fourier_linear_forward.1} parent=1 // loop_footer_branch
      %11 = sbr.rel target = $region3
    $region8: #{fourier_linear_forward.1} parent=1 // loop_exit
      _
    %664 = vsyncpa [#allocation5], 1
    %s665 = scalar_lea.sflag [#allocation5], 1
    %666 = vsyncpa %s665, 1

</llo_original>
